<compile_context>
chip_gen: v5e
topology: v5e:2x2
jax: 0.10.0
libtpu: 0.0.40
codegen_flags: <defaults>
</compile_context>

<pallas_src>
import functools

import jax
import jax.numpy as jnp
from jax.experimental import pallas as pl
from jax.experimental.pallas import tpu as pltpu


def _round_up(x, m):
    return (x + m - 1) // m * m


def _cdiv(a, b):
    return -(-a // b)


def _mlp_kernel(num_layers, u_idx_ref, i_idx_ref, u_tbl_ref, i_tbl_ref, *rest):
    # rest = (w0, b0, w1, b1, ..., w_{L-1}, b_{L-1}, wp_row, bp, out_ref)
    param_refs = rest[:-1]
    out_ref = rest[-1]

    tb = u_idx_ref.shape[0]

    def gather(idx_ref, tbl_ref):
        # Fused embedding lookup from the VMEM-resident table:
        # one-hot rows built on the VPU, row selection on the MXU.
        rows = tbl_ref.shape[0]
        cols = jax.lax.broadcasted_iota(jnp.int32, (tb, rows), 1)
        onehot = jnp.where(idx_ref[...] == cols, 1.0, 0.0).astype(tbl_ref.dtype)
        return jnp.dot(onehot, tbl_ref[...], preferred_element_type=jnp.float32)

    u_emb = gather(u_idx_ref, u_tbl_ref)          # (tb, D) f32 (exact bf16 rows)
    i_emb = gather(i_idx_ref, i_tbl_ref)          # (tb, D) f32

    # torch.cat((user, item), -1): lane concat of two 128-wide tiles.
    h = jnp.concatenate([u_emb, i_emb], axis=-1).astype(jnp.bfloat16)

    for layer in range(num_layers):
        w_ref = param_refs[2 * layer]
        b_ref = param_refs[2 * layer + 1]
        h = jnp.dot(h.astype(w_ref.dtype), w_ref[...],
                    preferred_element_type=jnp.float32) + b_ref[...]
        h = jnp.maximum(h, 0.0)                   # ReLU (dropout == identity)

    # Predict head (factor_num -> 1): VPU multiply + lane reduction.
    wp_ref = param_refs[-2]                       # (1, factor_num) f32
    bp_ref = param_refs[-1]                       # (1, 1) f32
    pred = jnp.sum(h * wp_ref[...], axis=-1, keepdims=True) + bp_ref[...]
    out_ref[...] = pred.astype(out_ref.dtype)


def prepare_params(params):
    """One-time host/device-side prep (NOT per forward call): cast tables and
    MLP weights to bf16, pad table rows to a lane-dense multiple of 128."""
    def pad_rows(t):
        r = t.shape[0]
        rp = _round_up(r, 128)
        return jnp.pad(t, ((0, rp - r), (0, 0))) if rp != r else t

    return {
        "user_table": pad_rows(params["embed_user"]).astype(jnp.bfloat16),
        "item_table": pad_rows(params["embed_item"]).astype(jnp.bfloat16),
        "mlp_w": [w.astype(jnp.bfloat16) for w in params["mlp_w"]],
        "mlp_b": [b.astype(jnp.float32) for b in params["mlp_b"]],
        "pred_w_row": params["pred_w"].reshape(1, -1).astype(jnp.float32),
        "pred_b": params["pred_b"].astype(jnp.float32),
        "num_layers": len(params["mlp_w"]),
        "embed_dim": params["embed_user"].shape[1],
    }


def mlp_forward(user, item, prep, *, block_b=1024):
    """NCF-MLP forward.  user/item: int (B,) ids.  prep: prepare_params(...)."""
    B = user.shape[0]
    D = prep["embed_dim"]
    num_layers = prep["num_layers"]
    factor_num = prep["pred_w_row"].shape[1]

    # Batch tiling: large tiles, minimal tail padding, even grid for v7x megacore.
    nblocks = max(1, _cdiv(B, block_b))
    if nblocks > 1 and nblocks % 2:
        nblocks += 1
    tb = _round_up(_cdiv(B, nblocks), 8)
    b_pad = tb * nblocks

    u_idx = user.astype(jnp.int32).reshape(B, 1)
    i_idx = item.astype(jnp.int32).reshape(B, 1)
    if b_pad != B:
        pad = b_pad - B
        u_idx = jnp.pad(u_idx, ((0, pad), (0, 0)))
        i_idx = jnp.pad(i_idx, ((0, pad), (0, 0)))

    u_tbl, i_tbl = prep["user_table"], prep["item_table"]
    flat_params = []
    for w, b in zip(prep["mlp_w"], prep["mlp_b"]):
        flat_params.extend([w, b])
    flat_params.extend([prep["pred_w_row"], prep["pred_b"]])

    def _resident_spec(a):
        # Full-array block, constant index map -> loaded once, stays in VMEM.
        return pl.BlockSpec(a.shape, lambda i: (0, 0))

    in_specs = (
        [pl.BlockSpec((tb, 1), lambda i: (i, 0)),       # user ids (streamed)
         pl.BlockSpec((tb, 1), lambda i: (i, 0)),       # item ids (streamed)
         _resident_spec(u_tbl),
         _resident_spec(i_tbl)]
        + [_resident_spec(a) for a in flat_params]
    )

    gather_flops = 2 * b_pad * D * (u_tbl.shape[0] + i_tbl.shape[0])
    mlp_flops = 2 * b_pad * sum(w.shape[0] * w.shape[1] for w in prep["mlp_w"])
    head_flops = 2 * b_pad * factor_num
    bytes_accessed = (
        2 * b_pad * 4                                              # indices
        + sum(a.size * a.dtype.itemsize for a in [u_tbl, i_tbl] + flat_params)
        + b_pad * 4                                                # output
    )

    out = pl.pallas_call(
        functools.partial(_mlp_kernel, num_layers),
        out_shape=jax.ShapeDtypeStruct((b_pad, 1), jnp.float32),
        grid=(nblocks,),
        in_specs=in_specs,
        out_specs=pl.BlockSpec((tb, 1), lambda i: (i, 0)),
        compiler_params=pltpu.CompilerParams(
            dimension_semantics=("parallel",)),
        cost_estimate=pl.CostEstimate(
            flops=gather_flops + mlp_flops + head_flops,
            transcendentals=0,
            bytes_accessed=bytes_accessed),
    )(u_idx, i_idx, u_tbl, i_tbl, *flat_params)

    return out[:B, 0]                                   # prediction.view(-1)


def _reference_forward(user, item, params):
    """Pure-JAX reference with the same bf16 weights / f32 accumulation."""
    u = jnp.take(params["embed_user"], user, axis=0).astype(jnp.bfloat16)
    i = jnp.take(params["embed_item"], item, axis=0).astype(jnp.bfloat16)
    h = jnp.concatenate([u, i], axis=-1)
    for w, b in zip(params["mlp_w"], params["mlp_b"]):
        h = jnp.dot(h.astype(jnp.bfloat16), w.astype(jnp.bfloat16),
                    preferred_element_type=jnp.float32) + b
        h = jnp.maximum(h, 0.0)
    pred = jnp.dot(h, params["pred_w"],
                   preferred_element_type=jnp.float32) + params["pred_b"]
    return pred.reshape(-1)


def init_params(key, user_num, item_num, factor_num, num_layers):
    embed_dim = factor_num * (2 ** (num_layers - 1))
    keys = jax.random.split(key, 3 + num_layers)

    params = {
        "embed_user": 0.01 * jax.random.normal(
            keys[0], (user_num, embed_dim), dtype=jnp.float32),
        "embed_item": 0.01 * jax.random.normal(
            keys[1], (item_num, embed_dim), dtype=jnp.float32),
        "mlp_w": [],
        "mlp_b": [],
    }
    for i in range(num_layers):
        in_size = factor_num * (2 ** (num_layers - i))
        out_size = in_size // 2
        limit = (6.0 / (in_size + out_size)) ** 0.5     # Xavier-uniform
        w = jax.random.uniform(keys[2 + i], (in_size, out_size),
                               minval=-limit, maxval=limit, dtype=jnp.float32)
        params["mlp_w"].append(w)
        params["mlp_b"].append(jnp.zeros((1, out_size), dtype=jnp.float32))

    limit = (3.0 / factor_num) ** 0.5                   # kaiming-uniform-ish
    params["pred_w"] = jax.random.uniform(keys[-1], (factor_num, 1),
                                          minval=-limit, maxval=limit,
                                          dtype=jnp.float32)
    params["pred_b"] = jnp.zeros((1, 1), dtype=jnp.float32)
    return params


if __name__ == "__main__":
    user_num, item_num = 100, 200
    factor_num, num_layers = 32, 3   # embed dim = 32 * 2**2 = 128, concat = 256

    key = jax.random.PRNGKey(0)
    pkey, ukey, ikey = jax.random.split(key, 3)
    params = init_params(pkey, user_num, item_num, factor_num, num_layers)
    prep = prepare_params(params)    # one-time bf16 cast / padding

    # Small batch.
    batch = 8
    user = jax.random.randint(ukey, (batch,), 0, user_num, dtype=jnp.int32)
    item = jax.random.randint(ikey, (batch,), 0, item_num, dtype=jnp.int32)
    pred = mlp_forward(user, item, prep)
    jax.block_until_ready(pred)
    assert pred.shape == (batch,)
    ref = _reference_forward(user, item, params)
    assert jnp.allclose(pred, ref, atol=1e-4, rtol=1e-2), (pred, ref)

    # Non-multiple-of-8 batch (padded tail path, single block).
    batch2 = 300
    u2 = jax.random.randint(jax.random.PRNGKey(1), (batch2,), 0, user_num,
                            dtype=jnp.int32)
    i2 = jax.random.randint(jax.random.PRNGKey(2), (batch2,), 0, item_num,
                            dtype=jnp.int32)
    pred2 = mlp_forward(u2, i2, prep)
    jax.block_until_ready(pred2)
    assert pred2.shape == (batch2,)
    ref2 = _reference_forward(u2, i2, params)
    assert jnp.allclose(pred2, ref2, atol=1e-4, rtol=1e-2)

    # Multi-block path (even grid, resident params reused across steps).
    batch3 = 2500
    u3 = jax.random.randint(jax.random.PRNGKey(3), (batch3,), 0, user_num,
                            dtype=jnp.int32)
    i3 = jax.random.randint(jax.random.PRNGKey(4), (batch3,), 0, item_num,
                            dtype=jnp.int32)
    pred3 = mlp_forward(u3, i3, prep)
    jax.block_until_ready(pred3)
    assert pred3.shape == (batch3,)
    ref3 = _reference_forward(u3, i3, params)
    assert jnp.allclose(pred3, ref3, atol=1e-4, rtol=1e-2)

    print("KERNEL_OK")
</pallas_src>

<mosaic_0001>
module attributes {stable_mosaic.version = 11 : i64} {
  func.func @_mlp_kernel(%arg0: i32, %arg1: memref<8x1xi32, #tpu.memory_space<vmem>>, %arg2: memref<8x1xi32, #tpu.memory_space<vmem>>, %arg3: memref<128x128xbf16, #tpu.memory_space<vmem>>, %arg4: memref<256x128xbf16, #tpu.memory_space<vmem>>, %arg5: memref<256x128xbf16, #tpu.memory_space<vmem>>, %arg6: memref<1x128xf32, #tpu.memory_space<vmem>>, %arg7: memref<128x64xbf16, #tpu.memory_space<vmem>>, %arg8: memref<1x64xf32, #tpu.memory_space<vmem>>, %arg9: memref<64x32xbf16, #tpu.memory_space<vmem>>, %arg10: memref<1x32xf32, #tpu.memory_space<vmem>>, %arg11: memref<1x32xf32, #tpu.memory_space<vmem>>, %arg12: memref<1x1xf32, #tpu.memory_space<vmem>>, %arg13: memref<8x1xf32, #tpu.memory_space<vmem>>) attributes {dimension_semantics = [#tpu.dimension_semantics<parallel>], iteration_bounds = array<i64: 1>, scalar_prefetch = 0 : i64, scratch_operands = 0 : i64, tpu.core_type = #tpu.core_type<tc>, window_params = [{transform_indices = @transform_0, window_bounds = array<i64: 8, 1>}, {transform_indices = @transform_1, window_bounds = array<i64: 8, 1>}, {pipeline_mode = #tpu.pipeline_mode<synchronous>, transform_indices = @transform_2, window_bounds = array<i64: 128, 128>}, {pipeline_mode = #tpu.pipeline_mode<synchronous>, transform_indices = @transform_3, window_bounds = array<i64: 256, 128>}, {pipeline_mode = #tpu.pipeline_mode<synchronous>, transform_indices = @transform_4, window_bounds = array<i64: 256, 128>}, {pipeline_mode = #tpu.pipeline_mode<synchronous>, transform_indices = @transform_5, window_bounds = array<i64: 1, 128>}, {pipeline_mode = #tpu.pipeline_mode<synchronous>, transform_indices = @transform_6, window_bounds = array<i64: 128, 64>}, {pipeline_mode = #tpu.pipeline_mode<synchronous>, transform_indices = @transform_7, window_bounds = array<i64: 1, 64>}, {pipeline_mode = #tpu.pipeline_mode<synchronous>, transform_indices = @transform_8, window_bounds = array<i64: 64, 32>}, {pipeline_mode = #tpu.pipeline_mode<synchronous>, transform_indices = @transform_9, window_bounds = array<i64: 1, 32>}, {pipeline_mode = #tpu.pipeline_mode<synchronous>, transform_indices = @transform_10, window_bounds = array<i64: 1, 32>}, {pipeline_mode = #tpu.pipeline_mode<synchronous>, transform_indices = @transform_11, window_bounds = array<i64: 1, 1>}, {transform_indices = @transform_12, window_bounds = array<i64: 8, 1>}]} {
    %0 = tpu.iota {dimensions = array<i32: 1>} : vector<8x128xi32>
    %c0 = arith.constant 0 : index
    %c0_0 = arith.constant 0 : index
    %1 = vector.load %arg1[%c0, %c0_0] : memref<8x1xi32, #tpu.memory_space<vmem>>, vector<8x1xi32>
    %2 = vector.broadcast %1 : vector<8x1xi32> to vector<8x128xi32>
    %3 = arith.cmpi eq, %2, %0 : vector<8x128xi32>
    %cst = arith.constant 1.000000e+00 : f32
    %cst_1 = arith.constant 0.000000e+00 : f32
    %4 = vector.broadcast %cst : f32 to vector<8x128xf32>
    %5 = vector.broadcast %cst_1 : f32 to vector<8x128xf32>
    %6 = arith.select %3, %4, %5 : vector<8x128xi1>, vector<8x128xf32>
    %7 = arith.truncf %6 : vector<8x128xf32> to vector<8x128xbf16>
    %c0_2 = arith.constant 0 : index
    %c0_3 = arith.constant 0 : index
    %8 = vector.load %arg3[%c0_2, %c0_3] : memref<128x128xbf16, #tpu.memory_space<vmem>>, vector<128x128xbf16>
    %cst_4 = arith.constant dense<0.000000e+00> : vector<8x128xf32>
    %9 = tpu.matmul %7, %8, %cst_4 {dimension_numbers = #tpu.dot_dimension_numbers<[1], [0], [0], [1], [0, 0, 1, 1], [], []>} : vector<8x128xbf16>, vector<128x128xbf16>, vector<8x128xf32> -> vector<8x128xf32>
    %10 = tpu.iota {dimensions = array<i32: 1>} : vector<8x256xi32>
    %c0_5 = arith.constant 0 : index
    %c0_6 = arith.constant 0 : index
    %11 = vector.load %arg2[%c0_5, %c0_6] : memref<8x1xi32, #tpu.memory_space<vmem>>, vector<8x1xi32>
    %12 = vector.broadcast %11 : vector<8x1xi32> to vector<8x256xi32>
    %13 = arith.cmpi eq, %12, %10 : vector<8x256xi32>
    %cst_7 = arith.constant 1.000000e+00 : f32
    %cst_8 = arith.constant 0.000000e+00 : f32
    %14 = vector.broadcast %cst_7 : f32 to vector<8x256xf32>
    %15 = vector.broadcast %cst_8 : f32 to vector<8x256xf32>
    %16 = arith.select %13, %14, %15 : vector<8x256xi1>, vector<8x256xf32>
    %17 = arith.truncf %16 : vector<8x256xf32> to vector<8x256xbf16>
    %c0_9 = arith.constant 0 : index
    %c0_10 = arith.constant 0 : index
    %18 = vector.load %arg4[%c0_9, %c0_10] : memref<256x128xbf16, #tpu.memory_space<vmem>>, vector<256x128xbf16>
    %cst_11 = arith.constant dense<0.000000e+00> : vector<8x128xf32>
    %19 = tpu.matmul %17, %18, %cst_11 {dimension_numbers = #tpu.dot_dimension_numbers<[1], [0], [0], [1], [0, 0, 1, 1], [], []>} : vector<8x256xbf16>, vector<256x128xbf16>, vector<8x128xf32> -> vector<8x128xf32>
    %20 = tpu.concatenate %9, %19 in 1 : vector<8x128xf32>, vector<8x128xf32> -> vector<8x256xf32>
    %21 = arith.truncf %20 : vector<8x256xf32> to vector<8x256xbf16>
    %c0_12 = arith.constant 0 : index
    %c0_13 = arith.constant 0 : index
    %22 = vector.load %arg5[%c0_12, %c0_13] : memref<256x128xbf16, #tpu.memory_space<vmem>>, vector<256x128xbf16>
    %cst_14 = arith.constant dense<0.000000e+00> : vector<8x128xf32>
    %23 = tpu.matmul %21, %22, %cst_14 {dimension_numbers = #tpu.dot_dimension_numbers<[1], [0], [0], [1], [0, 0, 1, 1], [], []>} : vector<8x256xbf16>, vector<256x128xbf16>, vector<8x128xf32> -> vector<8x128xf32>
    %c0_15 = arith.constant 0 : index
    %c0_16 = arith.constant 0 : index
    %24 = vector.load %arg6[%c0_15, %c0_16] : memref<1x128xf32, #tpu.memory_space<vmem>>, vector<1x128xf32>
    %25 = vector.broadcast %24 : vector<1x128xf32> to vector<8x128xf32>
    %26 = arith.addf %23, %25 : vector<8x128xf32>
    %cst_17 = arith.constant 0.000000e+00 : f32
    %27 = vector.broadcast %cst_17 : f32 to vector<8x128xf32>
    %28 = arith.maximumf %26, %27 : vector<8x128xf32>
    %29 = arith.truncf %28 : vector<8x128xf32> to vector<8x128xbf16>
    %c0_18 = arith.constant 0 : index
    %c0_19 = arith.constant 0 : index
    %30 = vector.load %arg7[%c0_18, %c0_19] : memref<128x64xbf16, #tpu.memory_space<vmem>>, vector<128x64xbf16>
    %cst_20 = arith.constant dense<0.000000e+00> : vector<8x64xf32>
    %31 = tpu.matmul %29, %30, %cst_20 {dimension_numbers = #tpu.dot_dimension_numbers<[1], [0], [0], [1], [0, 0, 1, 1], [], []>} : vector<8x128xbf16>, vector<128x64xbf16>, vector<8x64xf32> -> vector<8x64xf32>
    %c0_21 = arith.constant 0 : index
    %c0_22 = arith.constant 0 : index
    %32 = vector.load %arg8[%c0_21, %c0_22] : memref<1x64xf32, #tpu.memory_space<vmem>>, vector<1x64xf32>
    %33 = vector.broadcast %32 : vector<1x64xf32> to vector<8x64xf32>
    %34 = arith.addf %31, %33 : vector<8x64xf32>
    %cst_23 = arith.constant 0.000000e+00 : f32
    %35 = vector.broadcast %cst_23 : f32 to vector<8x64xf32>
    %36 = arith.maximumf %34, %35 : vector<8x64xf32>
    %37 = arith.truncf %36 : vector<8x64xf32> to vector<8x64xbf16>
    %c0_24 = arith.constant 0 : index
    %c0_25 = arith.constant 0 : index
    %38 = vector.load %arg9[%c0_24, %c0_25] : memref<64x32xbf16, #tpu.memory_space<vmem>>, vector<64x32xbf16>
    %cst_26 = arith.constant dense<0.000000e+00> : vector<8x32xf32>
    %39 = tpu.matmul %37, %38, %cst_26 {dimension_numbers = #tpu.dot_dimension_numbers<[1], [0], [0], [1], [0, 0, 1, 1], [], []>} : vector<8x64xbf16>, vector<64x32xbf16>, vector<8x32xf32> -> vector<8x32xf32>
    %c0_27 = arith.constant 0 : index
    %c0_28 = arith.constant 0 : index
    %40 = vector.load %arg10[%c0_27, %c0_28] : memref<1x32xf32, #tpu.memory_space<vmem>>, vector<1x32xf32>
    %41 = vector.broadcast %40 : vector<1x32xf32> to vector<8x32xf32>
    %42 = arith.addf %39, %41 : vector<8x32xf32>
    %cst_29 = arith.constant 0.000000e+00 : f32
    %43 = vector.broadcast %cst_29 : f32 to vector<8x32xf32>
    %44 = arith.maximumf %42, %43 : vector<8x32xf32>
    %c0_30 = arith.constant 0 : index
    %c0_31 = arith.constant 0 : index
    %45 = vector.load %arg11[%c0_30, %c0_31] : memref<1x32xf32, #tpu.memory_space<vmem>>, vector<1x32xf32>
    %46 = vector.broadcast %45 : vector<1x32xf32> to vector<8x32xf32>
    %47 = arith.mulf %44, %46 : vector<8x32xf32>
    %cst_32 = arith.constant dense<0.000000e+00> : vector<8xf32>
    %48 = vector.multi_reduction <add>, %47, %cst_32 [1] : vector<8x32xf32> to vector<8xf32>
    %49 = vector.shape_cast %48 : vector<8xf32> to vector<8x1xf32>
    %c0_33 = arith.constant 0 : index
    %c0_34 = arith.constant 0 : index
    %50 = vector.load %arg12[%c0_33, %c0_34] : memref<1x1xf32, #tpu.memory_space<vmem>>, vector<1x1xf32>
    %51 = vector.broadcast %50 : vector<1x1xf32> to vector<8x1xf32>
    %52 = arith.addf %49, %51 : vector<8x1xf32>
    %c0_35 = arith.constant 0 : index
    %c0_36 = arith.constant 0 : index
    %53 = vector.load %arg13[%c0_35, %c0_36] : memref<8x1xf32, #tpu.memory_space<vmem>>, vector<8x1xf32>
    tpu.vector_store %arg13[%c0_35, %c0_36], %52 {strides = array<i32>} : memref<8x1xf32, #tpu.memory_space<vmem>>, vector<8x1xf32>,
    return
  }
  func.func @transform_0(%arg0: i32) -> (i32, i32) {
    %c0_i32 = arith.constant 0 : i32
    %c0_i32_0 = arith.constant 0 : i32
    return %arg0, %c0_i32 : i32, i32
  }
  func.func @transform_1(%arg0: i32) -> (i32, i32) {
    %c0_i32 = arith.constant 0 : i32
    %c0_i32_0 = arith.constant 0 : i32
    return %arg0, %c0_i32 : i32, i32
  }
  func.func @transform_2(%arg0: i32) -> (i32, i32) {
    %c0_i32 = arith.constant 0 : i32
    %c0_i32_0 = arith.constant 0 : i32
    %c0_i32_1 = arith.constant 0 : i32
    return %c0_i32, %c0_i32_0 : i32, i32
  }
  func.func @transform_3(%arg0: i32) -> (i32, i32) {
    %c0_i32 = arith.constant 0 : i32
    %c0_i32_0 = arith.constant 0 : i32
    %c0_i32_1 = arith.constant 0 : i32
    return %c0_i32, %c0_i32_0 : i32, i32
  }
  func.func @transform_4(%arg0: i32) -> (i32, i32) {
    %c0_i32 = arith.constant 0 : i32
    %c0_i32_0 = arith.constant 0 : i32
    %c0_i32_1 = arith.constant 0 : i32
    return %c0_i32, %c0_i32_0 : i32, i32
  }
  func.func @transform_5(%arg0: i32) -> (i32, i32) {
    %c0_i32 = arith.constant 0 : i32
    %c0_i32_0 = arith.constant 0 : i32
    %c0_i32_1 = arith.constant 0 : i32
    return %c0_i32, %c0_i32_0 : i32, i32
  }
  func.func @transform_6(%arg0: i32) -> (i32, i32) {
    %c0_i32 = arith.constant 0 : i32
    %c0_i32_0 = arith.constant 0 : i32
    %c0_i32_1 = arith.constant 0 : i32
    return %c0_i32, %c0_i32_0 : i32, i32
  }
  func.func @transform_7(%arg0: i32) -> (i32, i32) {
    %c0_i32 = arith.constant 0 : i32
    %c0_i32_0 = arith.constant 0 : i32
    %c0_i32_1 = arith.constant 0 : i32
    return %c0_i32, %c0_i32_0 : i32, i32
  }
  func.func @transform_8(%arg0: i32) -> (i32, i32) {
    %c0_i32 = arith.constant 0 : i32
    %c0_i32_0 = arith.constant 0 : i32
    %c0_i32_1 = arith.constant 0 : i32
    return %c0_i32, %c0_i32_0 : i32, i32
  }
  func.func @transform_9(%arg0: i32) -> (i32, i32) {
    %c0_i32 = arith.constant 0 : i32
    %c0_i32_0 = arith.constant 0 : i32
    %c0_i32_1 = arith.constant 0 : i32
    return %c0_i32, %c0_i32_0 : i32, i32
  }
  func.func @transform_10(%arg0: i32) -> (i32, i32) {
    %c0_i32 = arith.constant 0 : i32
    %c0_i32_0 = arith.constant 0 : i32
    %c0_i32_1 = arith.constant 0 : i32
    return %c0_i32, %c0_i32_0 : i32, i32
  }
  func.func @transform_11(%arg0: i32) -> (i32, i32) {
    %c0_i32 = arith.constant 0 : i32
    %c0_i32_0 = arith.constant 0 : i32
    %c0_i32_1 = arith.constant 0 : i32
    return %c0_i32, %c0_i32_0 : i32, i32
  }
  func.func @transform_12(%arg0: i32) -> (i32, i32) {
    %c0_i32 = arith.constant 0 : i32
    %c0_i32_0 = arith.constant 0 : i32
    return %arg0, %c0_i32 : i32, i32
  }
}

</mosaic_0001>

<llo_original>
// kernel: tpu_custom_call.1
$region0: #{tpu_custom_call.1}
  #allocation0 [shape = 'u32[]', space=smem, size = 0x4, offset = 0x4, fixed_abs, tag = 'smem constant byte address 0x4 - core index']
  #allocation1 [shape = 'u32[72,128]{1,0:T(1,128)}', space=vmem, size = 0x9000, scoped, tag = 'internal scratch']
  #allocation2 [shape = 'f32[1,1]{1,0:T(1,128)S(1)}', space=vmem, size = 0x200, scoped, tag = 'scoped memory for tpu_custom_call.1']
  %s0 = inlined_call_operand.vmem [shape: s32[8,1], index: 0, kind: input, shape index: {}]
  %s1 = inlined_call_operand.vmem [shape: s32[8,1], index: 1, kind: input, shape index: {}]
  %s2 = inlined_call_operand.hbm [shape: bf16[128,128], index: 2, kind: input, shape index: {}]
  %s3 = inlined_call_operand.vmem [shape: bf16[256,128], index: 3, kind: input, shape index: {}]
  %s4 = inlined_call_operand.hbm [shape: bf16[256,128], index: 4, kind: input, shape index: {}]
  %s5 = inlined_call_operand.vmem [shape: f32[1,128], index: 5, kind: input, shape index: {}]
  %s6 = inlined_call_operand.vmem [shape: bf16[128,64], index: 6, kind: input, shape index: {}]
  %s7 = inlined_call_operand.vmem [shape: f32[1,64], index: 7, kind: input, shape index: {}]
  %s8 = inlined_call_operand.vmem [shape: bf16[64,32], index: 8, kind: input, shape index: {}]
  %s9 = inlined_call_operand.vmem [shape: f32[1,32], index: 9, kind: input, shape index: {}]
  %s10 = inlined_call_operand.vmem [shape: f32[1,32], index: 10, kind: input, shape index: {}]
  %s11 = inlined_call_operand.<no memory space> [shape: f32[1,1], index: 11, kind: input, shape index: {}]
  %s12 = inlined_call_operand.vmem [shape: f32[8,1], index: 12, kind: output, shape index: {}]
  %s13 = sld [smem:[#allocation0]]
  $region66: #{tpu_custom_call.1} parent=0
    _
  %s15 = ssub.s32 1, %s13
  %s16 = scalar_select 0, %s15, %s13
  %v17 = vstv %s11
  %18 = vst [vmem:[#allocation2] sm:$0x1] %v17
  $region1: #{tpu_custom_call.1} parent=0
    #allocation3 [shape = 'u8[32768]{0}', space=vmem, size = 0x8000, scoped, tag = 'input window, operand 2, single buffered']
    #allocation4 [shape = 's32[1]{0}', space=sflag, size = 0x4, scoped, tag = 'scoped memory for tpu_custom_call.1']
    #allocation5 [shape = 'u8[65536]{0}', space=vmem, size = 0x10000, scoped, tag = 'input window, operand 4, single buffered']
    #allocation6 [shape = 's32[1]{0}', space=sflag, size = 0x4, scoped, tag = 'scoped memory for tpu_custom_call.1']
    %19 = vsyncpa [#allocation4], 0
    %20 = vsyncpa [#allocation6], 0
    // Predicated region
    $region2: #{tpu_custom_call.1} parent=1 // pred_check
      _
    $region3: #{tpu_custom_call.1} parent=1 // pred_check_branch
      %22 = sbr.rel (0) target = $region5
    $region4: #{tpu_custom_call.1} parent=1 // pred_region
      _
    $region5: #{tpu_custom_call.1} parent=1 // pred_fallthru
      _
    // Predicated region
    $region6: #{tpu_custom_call.1} parent=1 // pred_check
      _
    $region7: #{tpu_custom_call.1} parent=1 // pred_check_branch
      %24 = sbr.rel (0) target = $region9
    $region8: #{tpu_custom_call.1} parent=1 // pred_region
      _
    $region9: #{tpu_custom_call.1} parent=1 // pred_fallthru
      _
    // Predicated region
    $region10: #{tpu_custom_call.1} parent=1 // pred_check
      _
    $region11: #{tpu_custom_call.1} parent=1 // pred_check_branch
      %26 = sbr.rel (0) target = $region13
    $region12: #{tpu_custom_call.1} parent=1 // pred_region
      %28 = vsyncadd [#allocation4], 0
      %s29 = sshll.u32 %s2, 4
      %s30 = int_to_ptr.hbm [resolvable:$true] %s29
      %s31 = sshll.u32 [#allocation3], 4
      %s32 = int_to_ptr.vmem [resolvable:$true] %s31
      %37 = dma.hbm_to_vmem [thread:$0]  %s30, 1024, %s32, [#allocation4], 64, 64, 4
    $region13: #{tpu_custom_call.1} parent=1 // pred_fallthru
      _
    // Predicated region
    $region14: #{tpu_custom_call.1} parent=1 // pred_check
      _
    $region15: #{tpu_custom_call.1} parent=1 // pred_check_branch
      %39 = sbr.rel (0) target = $region17
    $region16: #{tpu_custom_call.1} parent=1 // pred_region
      _
    $region17: #{tpu_custom_call.1} parent=1 // pred_fallthru
      _
    // Predicated region
    $region18: #{tpu_custom_call.1} parent=1 // pred_check
      _
    $region19: #{tpu_custom_call.1} parent=1 // pred_check_branch
      %41 = sbr.rel (0) target = $region21
    $region20: #{tpu_custom_call.1} parent=1 // pred_region
      %43 = vsyncadd [#allocation6], 0
      %s44 = sshll.u32 %s4, 4
      %s45 = int_to_ptr.hbm [resolvable:$true] %s44
      %s46 = sshll.u32 [#allocation5], 4
      %s47 = int_to_ptr.vmem [resolvable:$true] %s46
      %52 = dma.hbm_to_vmem [thread:$0]  %s45, 2048, %s47, [#allocation6], 64, 64, 4
    $region21: #{tpu_custom_call.1} parent=1 // pred_fallthru
      _
    // Predicated region
    $region22: #{tpu_custom_call.1} parent=1 // pred_check
      _
    $region23: #{tpu_custom_call.1} parent=1 // pred_check_branch
      %54 = sbr.rel (0) target = $region25
    $region24: #{tpu_custom_call.1} parent=1 // pred_region
      _
    $region25: #{tpu_custom_call.1} parent=1 // pred_fallthru
      _
    // Predicated region
    $region26: #{tpu_custom_call.1} parent=1 // pred_check
      _
    $region27: #{tpu_custom_call.1} parent=1 // pred_check_branch
      %56 = sbr.rel (0) target = $region29
    $region28: #{tpu_custom_call.1} parent=1 // pred_region
      _
    $region29: #{tpu_custom_call.1} parent=1 // pred_fallthru
      _
    // Predicated region
    $region30: #{tpu_custom_call.1} parent=1 // pred_check
      _
    $region31: #{tpu_custom_call.1} parent=1 // pred_check_branch
      %58 = sbr.rel (0) target = $region33
    $region32: #{tpu_custom_call.1} parent=1 // pred_region
      _
    $region33: #{tpu_custom_call.1} parent=1 // pred_fallthru
      _
    // Predicated region
    $region34: #{tpu_custom_call.1} parent=1 // pred_check
      _
    $region35: #{tpu_custom_call.1} parent=1 // pred_check_branch
      %60 = sbr.rel (0) target = $region37
    $region36: #{tpu_custom_call.1} parent=1 // pred_region
      _
    $region37: #{tpu_custom_call.1} parent=1 // pred_fallthru
      _
    // Predicated region
    $region38: #{tpu_custom_call.1} parent=1 // pred_check
      _
    $region39: #{tpu_custom_call.1} parent=1 // pred_check_branch
      %62 = sbr.rel (0) target = $region41
    $region40: #{tpu_custom_call.1} parent=1 // pred_region
      _
    $region41: #{tpu_custom_call.1} parent=1 // pred_fallthru
      _
    // Predicated region
    $region42: #{tpu_custom_call.1} parent=1 // pred_check
      _
    $region43: #{tpu_custom_call.1} parent=1 // pred_check_branch
      %64 = sbr.rel (0) target = $region45
    $region44: #{tpu_custom_call.1} parent=1 // pred_region
      _
    $region45: #{tpu_custom_call.1} parent=1 // pred_fallthru
      _
    // Predicated region
    $region46: #{tpu_custom_call.1} parent=1 // pred_check
      _
    $region47: #{tpu_custom_call.1} parent=1 // pred_check_branch
      %66 = sbr.rel (0) target = $region49
    $region48: #{tpu_custom_call.1} parent=1 // pred_region
      _
    $region49: #{tpu_custom_call.1} parent=1 // pred_fallthru
      _
    // Predicated region
    $region50: #{tpu_custom_call.1} parent=1 // pred_check
      _
    $region51: #{tpu_custom_call.1} parent=1 // pred_check_branch
      %68 = sbr.rel (0) target = $region53
    $region52: #{tpu_custom_call.1} parent=1 // pred_region
      %70 = dma.done [#allocation4], 1024
    $region53: #{tpu_custom_call.1} parent=1 // pred_fallthru
      _
    // Predicated region
    $region54: #{tpu_custom_call.1} parent=1 // pred_check
      _
    $region55: #{tpu_custom_call.1} parent=1 // pred_check_branch
      %72 = sbr.rel (0) target = $region57
    $region56: #{tpu_custom_call.1} parent=1 // pred_region
      %74 = dma.done [#allocation6], 2048
    $region57: #{tpu_custom_call.1} parent=1 // pred_fallthru
      _
    %v76 = vlaneseq
    %v77 = vand.u32 %v76, 127
    %v78 = vld [vmem:[%s0] sm:$0xff]
    %79 = vset.pattern.permute.xlu0 0
    %80 = vperm.xlu0 %79, %v78
    %v81 = vpop.permute.xlu0 %80
    %vm82 = vcmp.eq.s32.totalorder %v81, %v77
    %v83 = vsel %vm82, 1.0, 0.0
    %v84 = vpack.c.bf16 %v83, %v83
    %v85 = vld [vmem:[#allocation3] sm:$0xf]
    %v86 = vld [vmem:[#allocation3 + $0x4] sm:$0xf]
    %v87 = vld [vmem:[#allocation3 + $0x8] sm:$0xf]
    %v88 = vld [vmem:[#allocation3 + $0xc] sm:$0xf]
    %v89 = vld [vmem:[#allocation3 + $0x10] sm:$0xf]
    %v90 = vld [vmem:[#allocation3 + $0x14] sm:$0xf]
    %v91 = vld [vmem:[#allocation3 + $0x18] sm:$0xf]
    %v92 = vld [vmem:[#allocation3 + $0x1c] sm:$0xf]
    %v93 = vld [vmem:[#allocation3 + $0x20] sm:$0xf]
    %v94 = vld [vmem:[#allocation3 + $0x24] sm:$0xf]
    %v95 = vld [vmem:[#allocation3 + $0x28] sm:$0xf]
    %v96 = vld [vmem:[#allocation3 + $0x2c] sm:$0xf]
    %v97 = vld [vmem:[#allocation3 + $0x30] sm:$0xf]
    %v98 = vld [vmem:[#allocation3 + $0x34] sm:$0xf]
    %v99 = vld [vmem:[#allocation3 + $0x38] sm:$0xf]
    %v100 = vld [vmem:[#allocation3 + $0x3c] sm:$0xf]
    %v117 = vunpack.c.l.b16 %v85
    %v118 = vunpack.c.l.b16 %v86
    %v119 = vunpack.c.l.b16 %v87
    %v120 = vunpack.c.l.b16 %v88
    %v121 = vunpack.c.l.b16 %v89
    %v122 = vunpack.c.l.b16 %v90
    %v123 = vunpack.c.l.b16 %v91
    %v124 = vunpack.c.l.b16 %v92
    %v125 = vunpack.c.l.b16 %v93
    %v126 = vunpack.c.l.b16 %v94
    %v127 = vunpack.c.l.b16 %v95
    %v128 = vunpack.c.l.b16 %v96
    %v129 = vunpack.c.l.b16 %v97
    %v130 = vunpack.c.l.b16 %v98
    %v131 = vunpack.c.l.b16 %v99
    %v132 = vunpack.c.l.b16 %v100
    %v133 = vpack.c.b16 %v118, %v117
    %v134 = vpack.c.b16 %v120, %v119
    %v135 = vpack.c.b16 %v122, %v121
    %v136 = vpack.c.b16 %v124, %v123
    %v137 = vpack.c.b16 %v126, %v125
    %v138 = vpack.c.b16 %v128, %v127
    %v139 = vpack.c.b16 %v130, %v129
    %v140 = vpack.c.b16 %v132, %v131
    %149 = vmatpush.bf16.msra.mxu0 %v140
    %150 = vmatpush.bf16.msra.mxu0 %v139
    %151 = vmatpush.bf16.msra.mxu0 %v138
    %152 = vmatpush.bf16.msra.mxu0 %v137
    %153 = vmatpush.bf16.msra.mxu0 %v136
    %154 = vmatpush.bf16.msra.mxu0 %v135
    %155 = vmatpush.bf16.msra.mxu0 %v134
    %156 = vmatpush.bf16.msra.mxu0 %v133
    %157 = vmatmul.bf16.gmra.mxu0 %v84
    %v158 = vpop.f32.mrf.mxu0
    %v159 = vadd.f32 0.0, %v158
    %v160 = vpop.f32.mrf.mxu0
    %161 = vdwg.mxu0
    %v162 = vadd.s32 %v77, 128
    %v163 = vld [vmem:[%s1] sm:$0xff]
    %164 = vset.pattern.permute.xlu0 0
    %165 = vperm.xlu0 %164, %v163
    %v166 = vpop.permute.xlu0 %165
    %vm167 = vcmp.eq.s32.totalorder %v166, %v77
    %vm168 = vcmp.eq.s32.totalorder %v166, %v162
    %v169 = vsel %vm167, 1.0, 0.0
    %v170 = vsel %vm168, 1.0, 0.0
    %v171 = vpack.c.bf16 %v169, %v169
    %v172 = vpack.c.bf16 %v170, %v170
    %v173 = vld [vmem:[%s3] sm:$0xf]
    %v174 = vld [vmem:[%s3 + $0x4] sm:$0xf]
    %v175 = vld [vmem:[%s3 + $0x8] sm:$0xf]
    %v176 = vld [vmem:[%s3 + $0xc] sm:$0xf]
    %v177 = vld [vmem:[%s3 + $0x10] sm:$0xf]
    %v178 = vld [vmem:[%s3 + $0x14] sm:$0xf]
    %v179 = vld [vmem:[%s3 + $0x18] sm:$0xf]
    %v180 = vld [vmem:[%s3 + $0x1c] sm:$0xf]
    %v181 = vld [vmem:[%s3 + $0x20] sm:$0xf]
    %v182 = vld [vmem:[%s3 + $0x24] sm:$0xf]
    %v183 = vld [vmem:[%s3 + $0x28] sm:$0xf]
    %v184 = vld [vmem:[%s3 + $0x2c] sm:$0xf]
    %v185 = vld [vmem:[%s3 + $0x30] sm:$0xf]
    %v186 = vld [vmem:[%s3 + $0x34] sm:$0xf]
    %v187 = vld [vmem:[%s3 + $0x38] sm:$0xf]
    %v188 = vld [vmem:[%s3 + $0x3c] sm:$0xf]
    %v189 = vld [vmem:[%s3 + $0x40] sm:$0xf]
    %v190 = vld [vmem:[%s3 + $0x44] sm:$0xf]
    %v191 = vld [vmem:[%s3 + $0x48] sm:$0xf]
    %v192 = vld [vmem:[%s3 + $0x4c] sm:$0xf]
    %v193 = vld [vmem:[%s3 + $0x50] sm:$0xf]
    %v194 = vld [vmem:[%s3 + $0x54] sm:$0xf]
    %v195 = vld [vmem:[%s3 + $0x58] sm:$0xf]
    %v196 = vld [vmem:[%s3 + $0x5c] sm:$0xf]
    %v197 = vld [vmem:[%s3 + $0x60] sm:$0xf]
    %v198 = vld [vmem:[%s3 + $0x64] sm:$0xf]
    %v199 = vld [vmem:[%s3 + $0x68] sm:$0xf]
    %v200 = vld [vmem:[%s3 + $0x6c] sm:$0xf]
    %v201 = vld [vmem:[%s3 + $0x70] sm:$0xf]
    %v202 = vld [vmem:[%s3 + $0x74] sm:$0xf]
    %v203 = vld [vmem:[%s3 + $0x78] sm:$0xf]
    %v204 = vld [vmem:[%s3 + $0x7c] sm:$0xf]
    %v237 = vunpack.c.l.b16 %v173
    %v238 = vunpack.c.l.b16 %v174
    %v239 = vunpack.c.l.b16 %v175
    %v240 = vunpack.c.l.b16 %v176
    %v241 = vunpack.c.l.b16 %v177
    %v242 = vunpack.c.l.b16 %v178
    %v243 = vunpack.c.l.b16 %v179
    %v244 = vunpack.c.l.b16 %v180
    %v245 = vunpack.c.l.b16 %v181
    %v246 = vunpack.c.l.b16 %v182
    %v247 = vunpack.c.l.b16 %v183
    %v248 = vunpack.c.l.b16 %v184
    %v249 = vunpack.c.l.b16 %v185
    %v250 = vunpack.c.l.b16 %v186
    %v251 = vunpack.c.l.b16 %v187
    %v252 = vunpack.c.l.b16 %v188
    %v253 = vunpack.c.l.b16 %v189
    %v254 = vunpack.c.l.b16 %v190
    %v255 = vunpack.c.l.b16 %v191
    %v256 = vunpack.c.l.b16 %v192
    %v257 = vunpack.c.l.b16 %v193
    %v258 = vunpack.c.l.b16 %v194
    %v259 = vunpack.c.l.b16 %v195
    %v260 = vunpack.c.l.b16 %v196
    %v261 = vunpack.c.l.b16 %v197
    %v262 = vunpack.c.l.b16 %v198
    %v263 = vunpack.c.l.b16 %v199
    %v264 = vunpack.c.l.b16 %v200
    %v265 = vunpack.c.l.b16 %v201
    %v266 = vunpack.c.l.b16 %v202
    %v267 = vunpack.c.l.b16 %v203
    %v268 = vunpack.c.l.b16 %v204
    %v269 = vpack.c.b16 %v238, %v237
    %v270 = vpack.c.b16 %v240, %v239
    %v271 = vpack.c.b16 %v242, %v241
    %v272 = vpack.c.b16 %v244, %v243
    %v273 = vpack.c.b16 %v246, %v245
    %v274 = vpack.c.b16 %v248, %v247
    %v275 = vpack.c.b16 %v250, %v249
    %v276 = vpack.c.b16 %v252, %v251
    %v277 = vpack.c.b16 %v254, %v253
    %v278 = vpack.c.b16 %v256, %v255
    %v279 = vpack.c.b16 %v258, %v257
    %v280 = vpack.c.b16 %v260, %v259
    %v281 = vpack.c.b16 %v262, %v261
    %v282 = vpack.c.b16 %v264, %v263
    %v283 = vpack.c.b16 %v266, %v265
    %v284 = vpack.c.b16 %v268, %v267
    %301 = vmatpush.bf16.msra.mxu0 %v276
    %302 = vmatpush.bf16.msra.mxu0 %v275
    %303 = vmatpush.bf16.msra.mxu0 %v274
    %304 = vmatpush.bf16.msra.mxu0 %v273
    %305 = vmatpush.bf16.msra.mxu0 %v272
    %306 = vmatpush.bf16.msra.mxu0 %v271
    %307 = vmatpush.bf16.msra.mxu0 %v270
    %308 = vmatpush.bf16.msra.mxu0 %v269
    %309 = vmatmul.bf16.gmra.mxu0 %v171
    %v310 = vpop.f32.mrf.mxu0
    %v311 = vadd.f32 0.0, %v310
    %v312 = vpop.f32.mrf.mxu0
    %313 = vdwg.mxu0
    %314 = vmatpush.bf16.msra.mxu0 %v284
    %315 = vmatpush.bf16.msra.mxu0 %v283
    %316 = vmatpush.bf16.msra.mxu0 %v282
    %317 = vmatpush.bf16.msra.mxu0 %v281
    %318 = vmatpush.bf16.msra.mxu0 %v280
    %319 = vmatpush.bf16.msra.mxu0 %v279
    %320 = vmatpush.bf16.msra.mxu0 %v278
    %321 = vmatpush.bf16.msra.mxu0 %v277
    %322 = vmatmul.bf16.gmra.mxu0 %v172
    %v323 = vpop.f32.mrf.mxu0
    %v324 = vadd.f32 %v311, %v323
    %v325 = vpop.f32.mrf.mxu0
    %326 = vdwg.mxu0
    %v327 = vpack.c.bf16 %v159, %v159
    %v328 = vpack.c.bf16 %v324, %v324
    %v329 = vld [vmem:[#allocation5] sm:$0xf]
    %v330 = vld [vmem:[#allocation5 + $0x4] sm:$0xf]
    %v331 = vld [vmem:[#allocation5 + $0x8] sm:$0xf]
    %v332 = vld [vmem:[#allocation5 + $0xc] sm:$0xf]
    %v333 = vld [vmem:[#allocation5 + $0x10] sm:$0xf]
    %v334 = vld [vmem:[#allocation5 + $0x14] sm:$0xf]
    %v335 = vld [vmem:[#allocation5 + $0x18] sm:$0xf]
    %v336 = vld [vmem:[#allocation5 + $0x1c] sm:$0xf]
    %v337 = vld [vmem:[#allocation5 + $0x20] sm:$0xf]
    %v338 = vld [vmem:[#allocation5 + $0x24] sm:$0xf]
    %v339 = vld [vmem:[#allocation5 + $0x28] sm:$0xf]
    %v340 = vld [vmem:[#allocation5 + $0x2c] sm:$0xf]
    %v341 = vld [vmem:[#allocation5 + $0x30] sm:$0xf]
    %v342 = vld [vmem:[#allocation5 + $0x34] sm:$0xf]
    %v343 = vld [vmem:[#allocation5 + $0x38] sm:$0xf]
    %v344 = vld [vmem:[#allocation5 + $0x3c] sm:$0xf]
    %v345 = vld [vmem:[#allocation5 + $0x40] sm:$0xf]
    %v346 = vld [vmem:[#allocation5 + $0x44] sm:$0xf]
    %v347 = vld [vmem:[#allocation5 + $0x48] sm:$0xf]
    %v348 = vld [vmem:[#allocation5 + $0x4c] sm:$0xf]
    %v349 = vld [vmem:[#allocation5 + $0x50] sm:$0xf]
    %v350 = vld [vmem:[#allocation5 + $0x54] sm:$0xf]
    %v351 = vld [vmem:[#allocation5 + $0x58] sm:$0xf]
    %v352 = vld [vmem:[#allocation5 + $0x5c] sm:$0xf]
    %v353 = vld [vmem:[#allocation5 + $0x60] sm:$0xf]
    %v354 = vld [vmem:[#allocation5 + $0x64] sm:$0xf]
    %v355 = vld [vmem:[#allocation5 + $0x68] sm:$0xf]
    %v356 = vld [vmem:[#allocation5 + $0x6c] sm:$0xf]
    %v357 = vld [vmem:[#allocation5 + $0x70] sm:$0xf]
    %v358 = vld [vmem:[#allocation5 + $0x74] sm:$0xf]
    %v359 = vld [vmem:[#allocation5 + $0x78] sm:$0xf]
    %v360 = vld [vmem:[#allocation5 + $0x7c] sm:$0xf]
    %v361 = vld [vmem:[%s5] sm:$0x1]
    %v363 = vperm.slane %v361, 0
    %v397 = vunpack.c.l.b16 %v329
    %v398 = vunpack.c.l.b16 %v330
    %v399 = vunpack.c.l.b16 %v331
    %v400 = vunpack.c.l.b16 %v332
    %v401 = vunpack.c.l.b16 %v333
    %v402 = vunpack.c.l.b16 %v334
    %v403 = vunpack.c.l.b16 %v335
    %v404 = vunpack.c.l.b16 %v336
    %v405 = vunpack.c.l.b16 %v337
    %v406 = vunpack.c.l.b16 %v338
    %v407 = vunpack.c.l.b16 %v339
    %v408 = vunpack.c.l.b16 %v340
    %v409 = vunpack.c.l.b16 %v341
    %v410 = vunpack.c.l.b16 %v342
    %v411 = vunpack.c.l.b16 %v343
    %v412 = vunpack.c.l.b16 %v344
    %v413 = vunpack.c.l.b16 %v345
    %v414 = vunpack.c.l.b16 %v346
    %v415 = vunpack.c.l.b16 %v347
    %v416 = vunpack.c.l.b16 %v348
    %v417 = vunpack.c.l.b16 %v349
    %v418 = vunpack.c.l.b16 %v350
    %v419 = vunpack.c.l.b16 %v351
    %v420 = vunpack.c.l.b16 %v352
    %v421 = vunpack.c.l.b16 %v353
    %v422 = vunpack.c.l.b16 %v354
    %v423 = vunpack.c.l.b16 %v355
    %v424 = vunpack.c.l.b16 %v356
    %v425 = vunpack.c.l.b16 %v357
    %v426 = vunpack.c.l.b16 %v358
    %v427 = vunpack.c.l.b16 %v359
    %v428 = vunpack.c.l.b16 %v360
    %v429 = vpack.c.b16 %v398, %v397
    %v430 = vpack.c.b16 %v400, %v399
    %v431 = vpack.c.b16 %v402, %v401
    %v432 = vpack.c.b16 %v404, %v403
    %v433 = vpack.c.b16 %v406, %v405
    %v434 = vpack.c.b16 %v408, %v407
    %v435 = vpack.c.b16 %v410, %v409
    %v436 = vpack.c.b16 %v412, %v411
    %v437 = vpack.c.b16 %v414, %v413
    %v438 = vpack.c.b16 %v416, %v415
    %v439 = vpack.c.b16 %v418, %v417
    %v440 = vpack.c.b16 %v420, %v419
    %v441 = vpack.c.b16 %v422, %v421
    %v442 = vpack.c.b16 %v424, %v423
    %v443 = vpack.c.b16 %v426, %v425
    %v444 = vpack.c.b16 %v428, %v427
    %461 = vmatpush.bf16.msra.mxu0 %v436
    %462 = vmatpush.bf16.msra.mxu0 %v435
    %463 = vmatpush.bf16.msra.mxu0 %v434
    %464 = vmatpush.bf16.msra.mxu0 %v433
    %465 = vmatpush.bf16.msra.mxu0 %v432
    %466 = vmatpush.bf16.msra.mxu0 %v431
    %467 = vmatpush.bf16.msra.mxu0 %v430
    %468 = vmatpush.bf16.msra.mxu0 %v429
    %469 = vmatmul.bf16.gmra.mxu0 %v327
    %v470 = vpop.f32.mrf.mxu0
    %v471 = vadd.f32 %v363, %v470
    %v472 = vpop.f32.mrf.mxu0
    %473 = vdwg.mxu0
    %474 = vmatpush.bf16.msra.mxu0 %v444
    %475 = vmatpush.bf16.msra.mxu0 %v443
    %476 = vmatpush.bf16.msra.mxu0 %v442
    %477 = vmatpush.bf16.msra.mxu0 %v441
    %478 = vmatpush.bf16.msra.mxu0 %v440
    %479 = vmatpush.bf16.msra.mxu0 %v439
    %480 = vmatpush.bf16.msra.mxu0 %v438
    %481 = vmatpush.bf16.msra.mxu0 %v437
    %482 = vmatmul.bf16.gmra.mxu0 %v328
    %v483 = vpop.f32.mrf.mxu0
    %v484 = vadd.f32 %v471, %v483
    %v485 = vpop.f32.mrf.mxu0
    %486 = vdwg.mxu0
    %v487 = vmax.f32 %v484, 0.0
    %v488 = vpack.c.bf16 %v487, %v487
    %v489 = vld [vmem:[%s6] sm:$0xf]
    %v490 = vld [vmem:[%s6 + $0x4] sm:$0xf]
    %v491 = vld [vmem:[%s6 + $0x8] sm:$0xf]
    %v492 = vld [vmem:[%s6 + $0xc] sm:$0xf]
    %v493 = vld [vmem:[%s6 + $0x10] sm:$0xf]
    %v494 = vld [vmem:[%s6 + $0x14] sm:$0xf]
    %v495 = vld [vmem:[%s6 + $0x18] sm:$0xf]
    %v496 = vld [vmem:[%s6 + $0x1c] sm:$0xf]
    %v497 = vld [vmem:[%s6 + $0x20] sm:$0xf]
    %v498 = vld [vmem:[%s6 + $0x24] sm:$0xf]
    %v499 = vld [vmem:[%s6 + $0x28] sm:$0xf]
    %v500 = vld [vmem:[%s6 + $0x2c] sm:$0xf]
    %v501 = vld [vmem:[%s6 + $0x30] sm:$0xf]
    %v502 = vld [vmem:[%s6 + $0x34] sm:$0xf]
    %v503 = vld [vmem:[%s6 + $0x38] sm:$0xf]
    %v504 = vld [vmem:[%s6 + $0x3c] sm:$0xf]
    %v505 = vld [vmem:[%s7] sm:$0x1]
    %v507 = vperm.slane %v505, 0
    %v525 = vunpack.c.l.b16 %v489
    %v526 = vunpack.c.l.b16 %v490
    %v527 = vunpack.c.l.b16 %v491
    %v528 = vunpack.c.l.b16 %v492
    %v529 = vunpack.c.l.b16 %v493
    %v530 = vunpack.c.l.b16 %v494
    %v531 = vunpack.c.l.b16 %v495
    %v532 = vunpack.c.l.b16 %v496
    %v533 = vunpack.c.l.b16 %v497
    %v534 = vunpack.c.l.b16 %v498
    %v535 = vunpack.c.l.b16 %v499
    %v536 = vunpack.c.l.b16 %v500
    %v537 = vunpack.c.l.b16 %v501
    %v538 = vunpack.c.l.b16 %v502
    %v539 = vunpack.c.l.b16 %v503
    %v540 = vunpack.c.l.b16 %v504
    %v541 = vpack.c.b16 %v526, %v525
    %v542 = vpack.c.b16 %v528, %v527
    %v543 = vpack.c.b16 %v530, %v529
    %v544 = vpack.c.b16 %v532, %v531
    %v545 = vpack.c.b16 %v534, %v533
    %v546 = vpack.c.b16 %v536, %v535
    %v547 = vpack.c.b16 %v538, %v537
    %v548 = vpack.c.b16 %v540, %v539
    %557 = vmatpush.bf16.msra.mxu0 %v548
    %558 = vmatpush.bf16.msra.mxu0 %v547
    %559 = vmatpush.bf16.msra.mxu0 %v546
    %560 = vmatpush.bf16.msra.mxu0 %v545
    %561 = vmatpush.bf16.msra.mxu0 %v544
    %562 = vmatpush.bf16.msra.mxu0 %v543
    %563 = vmatpush.bf16.msra.mxu0 %v542
    %564 = vmatpush.bf16.msra.mxu0 %v541
    %565 = vmatmul.bf16.gmra.mxu0 %v488
    %v566 = vpop.f32.mrf.mxu0
    %v567 = vadd.f32 %v507, %v566
    %v568 = vpop.f32.mrf.mxu0
    %569 = vdwg.mxu0
    %v570 = vmax.f32 %v567, 0.0
    %v571 = vpack.c.bf16 %v570, %v570
    %v572 = vld [vmem:[%s8] sm:$0xf]
    %v573 = vld [vmem:[%s8 + $0x4] sm:$0xf]
    %v574 = vld [vmem:[%s8 + $0x8] sm:$0xf]
    %v575 = vld [vmem:[%s8 + $0xc] sm:$0xf]
    %v576 = vld [vmem:[%s8 + $0x10] sm:$0xf]
    %v577 = vld [vmem:[%s8 + $0x14] sm:$0xf]
    %v578 = vld [vmem:[%s8 + $0x18] sm:$0xf]
    %v579 = vld [vmem:[%s8 + $0x1c] sm:$0xf]
    %v580 = vld [vmem:[%s9] sm:$0x1]
    %v582 = vperm.slane %v580, 0
    %v592 = vunpack.c.l.b16 %v572
    %v593 = vunpack.c.l.b16 %v573
    %v594 = vunpack.c.l.b16 %v574
    %v595 = vunpack.c.l.b16 %v575
    %v596 = vunpack.c.l.b16 %v576
    %v597 = vunpack.c.l.b16 %v577
    %v598 = vunpack.c.l.b16 %v578
    %v599 = vunpack.c.l.b16 %v579
    %v600 = vpack.c.b16 %v593, %v592
    %v601 = vpack.c.b16 %v595, %v594
    %v602 = vpack.c.b16 %v597, %v596
    %v603 = vpack.c.b16 %v599, %v598
    %vm608 = vcmask 523264
    %v610 = vsel %vm608, %v571, 0
    %612 = vmatpush.bf16.msra.mxu0 0
    %613 = vmatpush.bf16.msra.mxu0 0
    %614 = vmatpush.bf16.msra.mxu0 0
    %615 = vmatpush.bf16.msra.mxu0 0
    %616 = vmatpush.bf16.msra.mxu0 %v603
    %617 = vmatpush.bf16.msra.mxu0 %v602
    %618 = vmatpush.bf16.msra.mxu0 %v601
    %619 = vmatpush.bf16.msra.mxu0 %v600
    %620 = vmatmul.bf16.gmra.mxu0 %v610
    %v621 = vpop.f32.mrf.mxu0
    %v622 = vadd.f32 %v582, %v621
    %v623 = vpop.f32.mrf.mxu0
    %624 = vdwg.mxu0
    %v625 = vmax.f32 %v622, 0.0
    %v626 = vld [vmem:[%s10] sm:$0x1]
    %v628 = vperm.slane %v626, 0
    %v630 = vmul.f32 %v625, %v628
    %vm631 = vcmask 261120
    %v632 = vsel %vm631, %v630, 0.0
    %633 = vadd.xlane.f32.xlu0 %v632
    %v634 = vpop.xlane.xlu0 %633
    %v635 = vld [vmem:[#allocation2] sm:$0x1]
    %v637 = vperm.slane %v635, 0
    %v639 = vadd.f32 %v634, %v637
    %vm640 = vcmask 7168
    %641 = vst.msk [vmem:[%s12] sm:$0xff] %vm640, %v639
    // Predicated region
    $region58: #{tpu_custom_call.1} parent=1 // pred_check
      _
    $region59: #{tpu_custom_call.1} parent=1 // pred_check_branch
      %643 = sbr.rel (0) target = $region61
    $region60: #{tpu_custom_call.1} parent=1 // pred_region
      _
    $region61: #{tpu_custom_call.1} parent=1 // pred_fallthru
      _
    // Predicated region
    $region62: #{tpu_custom_call.1} parent=1 // pred_check
      _
    $region63: #{tpu_custom_call.1} parent=1 // pred_check_branch
      %645 = sbr.rel (0) target = $region65
    $region64: #{tpu_custom_call.1} parent=1 // pred_region
      _
    $region65: #{tpu_custom_call.1} parent=1 // pred_fallthru
      _
    %646 = vsyncpa [#allocation4], 1
    %647 = vsyncpa [#allocation6], 1

</llo_original>
